<compile_context>
chip_gen: v5e
topology: v5e:2x2
jax: 0.10.0
libtpu: 0.0.40
codegen_flags: <defaults>
</compile_context>

<pallas_src>
import functools
import math

import jax
import jax.numpy as jnp
from jax import lax
from jax.experimental import pallas as pl
from jax.experimental.pallas import tpu as pltpu


def _round_up(x, m):
    return ((x + m - 1) // m) * m


def _gated_attention_kernel(
    x_ref,      # (tq,  Din)      compute dtype   query/context tile
    mem_ref,    # (Lm,  Dmem)     compute dtype   memory (per batch, tile-invariant)
    mask_ref,   # (1,   Lm)       f32             memory mask
    w1i_ref,    # (Din, Hp)       compute dtype   input_linear_1.weight^T (hid padded)
    b1i_ref,    # (1,   Hp)       f32
    w1m_ref,    # (Dmem, Hp)      compute dtype   memory_linear_1.weight^T
    b1m_ref,    # (1,   Hp)       f32
    w2a_ref,    # (Din, Hp)       compute dtype   input_linear_2.weight[:, :Din]^T
    w2b_ref,    # (Dmem, Hp)      compute dtype   input_linear_2.weight[:, Din:]^T
    b2_ref,     # (1,   Hp)       f32
    out_ref,    # (tq,  Hp)       f32
    mdot_ref,   # scratch VMEM (Lm, Hp), compute dtype
    *,
    inv_scale,
    gate_method,
):
    cdt = mdot_ref.dtype

    # memory_dot is query-tile invariant: compute once per batch element and cache it.
    @pl.when(pl.program_id(1) == 0)
    def _():
        md = jnp.dot(mem_ref[...], w1m_ref[...], preferred_element_type=jnp.float32)
        md = jnp.maximum(md + b1m_ref[...], 0.0)
        mdot_ref[...] = md.astype(cdt)

    x = x_ref[...]                                                   # (tq, Din)
    xdot = jnp.dot(x, w1i_ref[...], preferred_element_type=jnp.float32)
    xdot = jnp.maximum(xdot + b1i_ref[...], 0.0)                     # (tq, Hp) f32

    # att = (input_dot @ memory_dot^T) / sqrt(input_dim), masked, softmax over Lm.
    att = lax.dot_general(
        xdot.astype(cdt), mdot_ref[...],
        (((1,), (1,)), ((), ())),                                    # contract hidden dim
        preferred_element_type=jnp.float32,
    ) * inv_scale                                                    # (tq, Lm) f32
    att = att - 1e30 * (1.0 - mask_ref[...])
    att = att - jnp.max(att, axis=-1, keepdims=True)
    p = jnp.exp(att)
    p = p * pl.reciprocal(jnp.sum(p, axis=-1, keepdims=True))        # one recip per row

    out_one = jnp.dot(p.astype(cdt), mem_ref[...],
                      preferred_element_type=jnp.float32)            # (tq, Dmem) f32

    # cat([input, y]) @ W2^T == input @ W2a^T + y @ W2b^T  (W2 pre-split in the wrapper)
    if gate_method == "gate_att_or":
        y = (x.astype(jnp.float32) - out_one).astype(cdt)
    else:  # 'no_gate' / 'gate_att_up'
        y = out_one.astype(cdt)
    z = (jnp.dot(x, w2a_ref[...], preferred_element_type=jnp.float32)
         + jnp.dot(y, w2b_ref[...], preferred_element_type=jnp.float32)
         + b2_ref[...])                                              # (tq, Hp) f32

    if gate_method == "gate_att_up":
        out = (1.0 / (1.0 + jnp.exp(-z))) * jnp.tanh(z)              # sigmoid(z)*tanh(z)
    else:                                                            # relu for the others
        out = jnp.maximum(z, 0.0)
    out_ref[...] = out.astype(out_ref.dtype)


def gated_attention(inp, memory, mask, params, *, gate_method="gate_att_up",
                    tile_q=128, compute_dtype=jnp.bfloat16, lane_multiple=128):
    """Fused Pallas GatedAttention forward.

    inp:    (N, Ld, input_dim)  f32
    memory: (N, Lm, memory_dim) f32
    mask:   (N, Lm)             f32 (1 = keep, 0 = masked)
    params: dict with PyTorch-layout weights:
        w1_in (hid, Din), b1_in (hid,), w1_mem (hid, Dmem), b1_mem (hid,),
        w2 (hid, Din+Dmem), b2 (hid,)
    returns (output (N, Ld, hid) f32, memory) like the PyTorch module.
    """
    if gate_method not in ("no_gate", "gate_att_or", "gate_att_up"):
        raise ValueError("Not support gate method: {}".format(gate_method))

    N, Ld, Din = inp.shape
    _, Lm, Dmem = memory.shape
    w1i, b1i = params["w1_in"], params["b1_in"]
    w1m, b1m = params["w1_mem"], params["b1_mem"]
    w2, b2 = params["w2"], params["b2"]
    hid = b2.shape[0]

    # Lane-dense hidden dim: pad hid to a multiple of `lane_multiple` with zero weight
    # columns / zero biases.  Padded output columns are exactly 0 and are sliced off.
    hid_pad = _round_up(hid, lane_multiple)
    pad_h = hid_pad - hid

    def prep_w(w_t):                       # (fan_in, hid) -> (fan_in, hid_pad), cast
        return jnp.pad(w_t, ((0, 0), (0, pad_h))).astype(compute_dtype)

    def prep_b(b):                         # (hid,) -> (1, hid_pad), keep f32
        return jnp.pad(b, (0, pad_h)).astype(jnp.float32)[None, :]

    w1i_t, b1i_2d = prep_w(w1i.T), prep_b(b1i)
    w1m_t, b1m_2d = prep_w(w1m.T), prep_b(b1m)
    w2a_t = prep_w(w2[:, :Din].T)          # input half of input_linear_2
    w2b_t = prep_w(w2[:, Din:].T)          # attended-memory half
    b2_2d = prep_b(b2)

    # Query-length tiling, sublane-aligned for the compute dtype (8 f32 / 16 bf16 rows).
    sublane = 8 * (4 // jnp.dtype(compute_dtype).itemsize)
    tq = _round_up(max(1, min(tile_q, Ld)), sublane)
    ld_pad = _round_up(Ld, tq)

    x = jnp.pad(inp, ((0, 0), (0, ld_pad - Ld), (0, 0))).astype(compute_dtype)
    mem = memory.astype(compute_dtype)
    mask3 = mask.astype(jnp.float32)[:, None, :]                     # (N, 1, Lm)

    kernel = functools.partial(
        _gated_attention_kernel,
        inv_scale=float(1.0 / math.sqrt(Din)),
        gate_method=gate_method,
    )

    const_map = lambda b, q: (0, 0)        # weights / biases: resident, never re-DMA'd

    out = pl.pallas_call(
        kernel,
        out_shape=jax.ShapeDtypeStruct((N, ld_pad, hid_pad), jnp.float32),
        grid_spec=pltpu.PrefetchScalarGridSpec(
            num_scalar_prefetch=0,
            grid=(N, ld_pad // tq),
            in_specs=[
                pl.BlockSpec((pl.Squeezed(), tq, Din), lambda b, q: (b, q, 0)),   # input
                pl.BlockSpec((pl.Squeezed(), Lm, Dmem), lambda b, q: (b, 0, 0)),  # memory
                pl.BlockSpec((pl.Squeezed(), 1, Lm), lambda b, q: (b, 0, 0)),     # mask
                pl.BlockSpec((Din, hid_pad), const_map),                          # W1_in^T
                pl.BlockSpec((1, hid_pad), const_map),                            # b1_in
                pl.BlockSpec((Dmem, hid_pad), const_map),                         # W1_mem^T
                pl.BlockSpec((1, hid_pad), const_map),                            # b1_mem
                pl.BlockSpec((Din, hid_pad), const_map),                          # W2a^T
                pl.BlockSpec((Dmem, hid_pad), const_map),                         # W2b^T
                pl.BlockSpec((1, hid_pad), const_map),                            # b2
            ],
            out_specs=pl.BlockSpec((pl.Squeezed(), tq, hid_pad),
                                   lambda b, q: (b, q, 0)),
            scratch_shapes=[pltpu.VMEM((Lm, hid_pad), compute_dtype)],            # memory_dot
        ),
        compiler_params=pltpu.CompilerParams(
            dimension_semantics=("parallel", "arbitrary"),
        ),
    )(x, mem, mask3, w1i_t, b1i_2d, w1m_t, b1m_2d, w2a_t, w2b_t, b2_2d)

    return out[:, :Ld, :hid], memory


def gated_attention_ref(inp, memory, mask, params, gate_method="gate_att_up"):
    """Pure-JAX f32 reference mirroring the PyTorch forward exactly."""
    hp = lax.Precision.HIGHEST
    input_dot = jax.nn.relu(
        jnp.matmul(inp, params["w1_in"].T, precision=hp) + params["b1_in"])
    memory_dot = jax.nn.relu(
        jnp.matmul(memory, params["w1_mem"].T, precision=hp) + params["b1_mem"])
    att = jnp.einsum("bld,bmd->blm", input_dot, memory_dot,
                     precision=hp) / math.sqrt(inp.shape[-1])
    att = att - 1e30 * (1.0 - mask[:, None, :])
    weight_one = jax.nn.softmax(att, axis=-1)
    output_one = jnp.einsum("blm,bmd->bld", weight_one, memory, precision=hp)
    if gate_method == "no_gate":
        cat = jnp.concatenate([inp, output_one], axis=-1)
        out = jax.nn.relu(jnp.matmul(cat, params["w2"].T, precision=hp) + params["b2"])
    elif gate_method == "gate_att_or":
        cat = jnp.concatenate([inp, inp - output_one], axis=-1)
        out = jax.nn.relu(jnp.matmul(cat, params["w2"].T, precision=hp) + params["b2"])
    elif gate_method == "gate_att_up":
        cat = jnp.concatenate([inp, output_one], axis=-1)
        z = jnp.matmul(cat, params["w2"].T, precision=hp) + params["b2"]
        out = jax.nn.sigmoid(z) * jnp.tanh(z)
    else:
        raise ValueError("Not support gate method: {}".format(gate_method))
    return out, memory


def init_gated_attention_params(key, input_dim, memory_dim, hid_dim):
    """PyTorch nn.Linear-style init: U(-1/sqrt(fan_in), 1/sqrt(fan_in))."""
    def linear(k, fan_in, fan_out):
        kw, kb = jax.random.split(k)
        bound = 1.0 / math.sqrt(fan_in)
        w = jax.random.uniform(kw, (fan_out, fan_in), jnp.float32, -bound, bound)
        b = jax.random.uniform(kb, (fan_out,), jnp.float32, -bound, bound)
        return w, b

    k1, k2, k3 = jax.random.split(key, 3)
    w1_in, b1_in = linear(k1, input_dim, hid_dim)
    w1_mem, b1_mem = linear(k2, memory_dim, hid_dim)
    w2, b2 = linear(k3, input_dim + memory_dim, hid_dim)
    return {"w1_in": w1_in, "b1_in": b1_in, "w1_mem": w1_mem, "b1_mem": b1_mem,
            "w2": w2, "b2": b2}


if __name__ == "__main__":
    key = jax.random.PRNGKey(0)
    N, Ld, Lm = 2, 40, 8
    input_dim, memory_dim, hid_dim = 32, 32, 32

    k_in, k_mem, k_mask, k_par = jax.random.split(key, 4)
    inp = jax.random.normal(k_in, (N, Ld, input_dim), dtype=jnp.float32)
    memory = jax.random.normal(k_mem, (N, Lm, memory_dim), dtype=jnp.float32)
    mask = (jax.random.uniform(k_mask, (N, Lm)) > 0.3).astype(jnp.float32)
    mask = mask.at[:, 0].set(1.0)  # at least one unmasked memory position per row

    params = init_gated_attention_params(k_par, input_dim, memory_dim, hid_dim)

    ref_out, _ = gated_attention_ref(inp, memory, mask, params)

    # f32 compute path (exercises multi-query-tile scratch reuse), moderate tolerance.
    out_f32, mem_out = gated_attention(inp, memory, mask, params,
                                       tile_q=16, compute_dtype=jnp.float32)
    out_f32 = jax.block_until_ready(out_f32)
    assert out_f32.shape == (N, Ld, hid_dim), out_f32.shape
    assert jnp.allclose(out_f32, ref_out, atol=1e-2, rtol=1e-2), "f32 mismatch vs reference"
    assert jnp.array_equal(mem_out, memory)

    # bf16 compute path (production config: bf16 HBM traffic + MXU, f32 accumulation).
    out_bf16, _ = gated_attention(inp, memory, mask, params,
                                  tile_q=16, compute_dtype=jnp.bfloat16)
    out_bf16 = jax.block_until_ready(out_bf16)
    assert out_bf16.shape == (N, Ld, hid_dim), out_bf16.shape
    assert jnp.allclose(out_bf16, ref_out, atol=5e-2, rtol=5e-2), "bf16 mismatch vs reference"

    # TODO(synk): self.dropout is stored by the PyTorch module but never applied in
    # forward(), so there is intentionally no dropout in the kernel.
    print("KERNEL_OK")
</pallas_src>

<mosaic_0001>
module attributes {stable_mosaic.version = 11 : i64} {
  func.func @_gated_attention_kernel(%arg0: i32, %arg1: i32, %arg2: memref<1x16x32xf32, #tpu.memory_space<vmem>>, %arg3: memref<1x8x32xf32, #tpu.memory_space<vmem>>, %arg4: memref<1x1x8xf32, #tpu.memory_space<vmem>>, %arg5: memref<32x128xf32, #tpu.memory_space<vmem>>, %arg6: memref<1x128xf32, #tpu.memory_space<vmem>>, %arg7: memref<32x128xf32, #tpu.memory_space<vmem>>, %arg8: memref<1x128xf32, #tpu.memory_space<vmem>>, %arg9: memref<32x128xf32, #tpu.memory_space<vmem>>, %arg10: memref<32x128xf32, #tpu.memory_space<vmem>>, %arg11: memref<1x128xf32, #tpu.memory_space<vmem>>, %arg12: memref<1x16x128xf32, #tpu.memory_space<vmem>>, %arg13: memref<8x128xf32, #tpu.memory_space<vmem>>) attributes {dimension_semantics = [#tpu.dimension_semantics<parallel>, #tpu.dimension_semantics<arbitrary>], iteration_bounds = array<i64: 2, 3>, scalar_prefetch = 0 : i64, scratch_operands = 1 : i64, tpu.core_type = #tpu.core_type<tc>, window_params = [{transform_indices = @transform_0, window_bounds = array<i64: 1, 16, 32>}, {transform_indices = @transform_1, window_bounds = array<i64: 1, 8, 32>}, {transform_indices = @transform_2, window_bounds = array<i64: 1, 1, 8>}, {pipeline_mode = #tpu.pipeline_mode<synchronous>, transform_indices = @transform_3, window_bounds = array<i64: 32, 128>}, {pipeline_mode = #tpu.pipeline_mode<synchronous>, transform_indices = @transform_4, window_bounds = array<i64: 1, 128>}, {pipeline_mode = #tpu.pipeline_mode<synchronous>, transform_indices = @transform_5, window_bounds = array<i64: 32, 128>}, {pipeline_mode = #tpu.pipeline_mode<synchronous>, transform_indices = @transform_6, window_bounds = array<i64: 1, 128>}, {pipeline_mode = #tpu.pipeline_mode<synchronous>, transform_indices = @transform_7, window_bounds = array<i64: 32, 128>}, {pipeline_mode = #tpu.pipeline_mode<synchronous>, transform_indices = @transform_8, window_bounds = array<i64: 32, 128>}, {pipeline_mode = #tpu.pipeline_mode<synchronous>, transform_indices = @transform_9, window_bounds = array<i64: 1, 128>}, {transform_indices = @transform_10, window_bounds = array<i64: 1, 16, 128>}]} {
    %c0_i32 = arith.constant 0 : i32
    %0 = arith.cmpi eq, %arg1, %c0_i32 : i32
    %1 = arith.extui %0 : i1 to i32
    %c0_i32_0 = arith.constant 0 : i32
    %2 = arith.cmpi ne, %1, %c0_i32_0 : i32
    scf.if %2 {
      %c0_37 = arith.constant 0 : index
      %c0_38 = arith.constant 0 : index
      %c0_39 = arith.constant 0 : index
      %57 = vector.load %arg3[%c0_37, %c0_38, %c0_39] : memref<1x8x32xf32, #tpu.memory_space<vmem>>, vector<1x8x32xf32>
      %58 = vector.shape_cast %57 : vector<1x8x32xf32> to vector<8x32xf32>
      %c0_40 = arith.constant 0 : index
      %c0_41 = arith.constant 0 : index
      %59 = vector.load %arg7[%c0_40, %c0_41] : memref<32x128xf32, #tpu.memory_space<vmem>>, vector<32x128xf32>
      %cst_42 = arith.constant dense<0.000000e+00> : vector<8x128xf32>
      %60 = tpu.matmul %58, %59, %cst_42 {dimension_numbers = #tpu.dot_dimension_numbers<[1], [0], [0], [1], [0, 0, 1, 1], [], []>} : vector<8x32xf32>, vector<32x128xf32>, vector<8x128xf32> -> vector<8x128xf32>
      %c0_43 = arith.constant 0 : index
      %c0_44 = arith.constant 0 : index
      %61 = vector.load %arg8[%c0_43, %c0_44] : memref<1x128xf32, #tpu.memory_space<vmem>>, vector<1x128xf32>
      %62 = vector.broadcast %61 : vector<1x128xf32> to vector<8x128xf32>
      %63 = arith.addf %60, %62 : vector<8x128xf32>
      %cst_45 = arith.constant 0.000000e+00 : f32
      %64 = vector.broadcast %cst_45 : f32 to vector<8x128xf32>
      %65 = arith.maximumf %63, %64 : vector<8x128xf32>
      %c0_46 = arith.constant 0 : index
      %c0_47 = arith.constant 0 : index
      %66 = vector.load %arg13[%c0_46, %c0_47] : memref<8x128xf32, #tpu.memory_space<vmem>>, vector<8x128xf32>
      tpu.vector_store %arg13[%c0_46, %c0_47], %65 {strides = array<i32>} : memref<8x128xf32, #tpu.memory_space<vmem>>, vector<8x128xf32>,
    } else {
    }
    %c0 = arith.constant 0 : index
    %c0_1 = arith.constant 0 : index
    %c0_2 = arith.constant 0 : index
    %3 = vector.load %arg2[%c0, %c0_1, %c0_2] : memref<1x16x32xf32, #tpu.memory_space<vmem>>, vector<1x16x32xf32>
    %4 = vector.shape_cast %3 : vector<1x16x32xf32> to vector<16x32xf32>
    %c0_3 = arith.constant 0 : index
    %c0_4 = arith.constant 0 : index
    %5 = vector.load %arg5[%c0_3, %c0_4] : memref<32x128xf32, #tpu.memory_space<vmem>>, vector<32x128xf32>
    %cst = arith.constant dense<0.000000e+00> : vector<16x128xf32>
    %6 = tpu.matmul %4, %5, %cst {dimension_numbers = #tpu.dot_dimension_numbers<[1], [0], [0], [1], [0, 0, 1, 1], [], []>} : vector<16x32xf32>, vector<32x128xf32>, vector<16x128xf32> -> vector<16x128xf32>
    %c0_5 = arith.constant 0 : index
    %c0_6 = arith.constant 0 : index
    %7 = vector.load %arg6[%c0_5, %c0_6] : memref<1x128xf32, #tpu.memory_space<vmem>>, vector<1x128xf32>
    %8 = vector.broadcast %7 : vector<1x128xf32> to vector<16x128xf32>
    %9 = arith.addf %6, %8 : vector<16x128xf32>
    %cst_7 = arith.constant 0.000000e+00 : f32
    %10 = vector.broadcast %cst_7 : f32 to vector<16x128xf32>
    %11 = arith.maximumf %9, %10 : vector<16x128xf32>
    %c0_8 = arith.constant 0 : index
    %c0_9 = arith.constant 0 : index
    %12 = vector.load %arg13[%c0_8, %c0_9] : memref<8x128xf32, #tpu.memory_space<vmem>>, vector<8x128xf32>
    %cst_10 = arith.constant dense<0.000000e+00> : vector<16x8xf32>
    %13 = tpu.matmul %11, %12, %cst_10 {dimension_numbers = #tpu.dot_dimension_numbers<[1], [1], [0], [0], [0, 0, 1, 0], [], []>} : vector<16x128xf32>, vector<8x128xf32>, vector<16x8xf32> -> vector<16x8xf32>
    %cst_11 = arith.constant 0.176776692 : f32
    %14 = vector.broadcast %cst_11 : f32 to vector<16x8xf32>
    %15 = arith.mulf %13, %14 : vector<16x8xf32>
    %c0_12 = arith.constant 0 : index
    %c0_13 = arith.constant 0 : index
    %c0_14 = arith.constant 0 : index
    %16 = vector.load %arg4[%c0_12, %c0_13, %c0_14] : memref<1x1x8xf32, #tpu.memory_space<vmem>>, vector<1x1x8xf32>
    %17 = vector.shape_cast %16 : vector<1x1x8xf32> to vector<1x8xf32>
    %cst_15 = arith.constant 1.000000e+00 : f32
    %18 = vector.broadcast %cst_15 : f32 to vector<1x8xf32>
    %19 = arith.subf %18, %17 : vector<1x8xf32>
    %cst_16 = arith.constant 1.000000e+30 : f32
    %20 = vector.broadcast %cst_16 : f32 to vector<1x8xf32>
    %21 = arith.mulf %20, %19 : vector<1x8xf32>
    %22 = vector.broadcast %21 : vector<1x8xf32> to vector<16x8xf32>
    %23 = arith.subf %15, %22 : vector<16x8xf32>
    %cst_17 = arith.constant dense<0xFF800000> : vector<16xf32>
    %24 = vector.multi_reduction <maximumf>, %23, %cst_17 [1] : vector<16x8xf32> to vector<16xf32>
    %25 = vector.shape_cast %24 : vector<16xf32> to vector<16x1xf32>
    %26 = vector.broadcast %25 : vector<16x1xf32> to vector<16x8xf32>
    %27 = arith.subf %23, %26 : vector<16x8xf32>
    %28 = math.exp %27 : vector<16x8xf32>
    %cst_18 = arith.constant dense<0.000000e+00> : vector<16xf32>
    %29 = vector.multi_reduction <add>, %28, %cst_18 [1] : vector<16x8xf32> to vector<16xf32>
    %30 = vector.shape_cast %29 : vector<16xf32> to vector<16x1xf32>
    %31 = tpu.reciprocal %30 : vector<16x1xf32> -> vector<16x1xf32>
    %32 = vector.broadcast %31 : vector<16x1xf32> to vector<16x8xf32>
    %33 = arith.mulf %28, %32 : vector<16x8xf32>
    %c0_19 = arith.constant 0 : index
    %c0_20 = arith.constant 0 : index
    %c0_21 = arith.constant 0 : index
    %34 = vector.load %arg3[%c0_19, %c0_20, %c0_21] : memref<1x8x32xf32, #tpu.memory_space<vmem>>, vector<1x8x32xf32>
    %35 = vector.shape_cast %34 : vector<1x8x32xf32> to vector<8x32xf32>
    %cst_22 = arith.constant dense<0.000000e+00> : vector<16x32xf32>
    %36 = tpu.matmul %33, %35, %cst_22 {dimension_numbers = #tpu.dot_dimension_numbers<[1], [0], [0], [1], [0, 0, 1, 1], [], []>} : vector<16x8xf32>, vector<8x32xf32>, vector<16x32xf32> -> vector<16x32xf32>
    %c0_23 = arith.constant 0 : index
    %c0_24 = arith.constant 0 : index
    %37 = vector.load %arg9[%c0_23, %c0_24] : memref<32x128xf32, #tpu.memory_space<vmem>>, vector<32x128xf32>
    %cst_25 = arith.constant dense<0.000000e+00> : vector<16x128xf32>
    %38 = tpu.matmul %4, %37, %cst_25 {dimension_numbers = #tpu.dot_dimension_numbers<[1], [0], [0], [1], [0, 0, 1, 1], [], []>} : vector<16x32xf32>, vector<32x128xf32>, vector<16x128xf32> -> vector<16x128xf32>
    %c0_26 = arith.constant 0 : index
    %c0_27 = arith.constant 0 : index
    %39 = vector.load %arg10[%c0_26, %c0_27] : memref<32x128xf32, #tpu.memory_space<vmem>>, vector<32x128xf32>
    %cst_28 = arith.constant dense<0.000000e+00> : vector<16x128xf32>
    %40 = tpu.matmul %36, %39, %cst_28 {dimension_numbers = #tpu.dot_dimension_numbers<[1], [0], [0], [1], [0, 0, 1, 1], [], []>} : vector<16x32xf32>, vector<32x128xf32>, vector<16x128xf32> -> vector<16x128xf32>
    %41 = arith.addf %38, %40 : vector<16x128xf32>
    %c0_29 = arith.constant 0 : index
    %c0_30 = arith.constant 0 : index
    %42 = vector.load %arg11[%c0_29, %c0_30] : memref<1x128xf32, #tpu.memory_space<vmem>>, vector<1x128xf32>
    %43 = vector.broadcast %42 : vector<1x128xf32> to vector<16x128xf32>
    %44 = arith.addf %41, %43 : vector<16x128xf32>
    %cst_31 = arith.constant 0.000000e+00 : f32
    %45 = vector.broadcast %cst_31 : f32 to vector<16x128xf32>
    %46 = arith.subf %45, %44 : vector<16x128xf32>
    %47 = math.exp %46 : vector<16x128xf32>
    %cst_32 = arith.constant 1.000000e+00 : f32
    %48 = vector.broadcast %cst_32 : f32 to vector<16x128xf32>
    %49 = arith.addf %48, %47 : vector<16x128xf32>
    %cst_33 = arith.constant 1.000000e+00 : f32
    %50 = vector.broadcast %cst_33 : f32 to vector<16x128xf32>
    %51 = arith.divf %50, %49 : vector<16x128xf32>
    %52 = math.tanh %44 : vector<16x128xf32>
    %53 = arith.mulf %51, %52 : vector<16x128xf32>
    %c0_34 = arith.constant 0 : index
    %c0_35 = arith.constant 0 : index
    %c0_36 = arith.constant 0 : index
    %54 = vector.load %arg12[%c0_34, %c0_35, %c0_36] : memref<1x16x128xf32, #tpu.memory_space<vmem>>, vector<1x16x128xf32>
    %55 = vector.shape_cast %54 : vector<1x16x128xf32> to vector<16x128xf32>
    %56 = vector.shape_cast %53 : vector<16x128xf32> to vector<1x16x128xf32>
    tpu.vector_store %arg12[%c0_34, %c0_35, %c0_36], %56 {strides = array<i32>} : memref<1x16x128xf32, #tpu.memory_space<vmem>>, vector<1x16x128xf32>,
    return
  }
  func.func @transform_0(%arg0: i32, %arg1: i32) -> (i32, i32, i32) {
    %c0_i32 = arith.constant 0 : i32
    %c0_i32_0 = arith.constant 0 : i32
    return %arg0, %arg1, %c0_i32 : i32, i32, i32
  }
  func.func @transform_1(%arg0: i32, %arg1: i32) -> (i32, i32, i32) {
    %c0_i32 = arith.constant 0 : i32
    %c0_i32_0 = arith.constant 0 : i32
    %c0_i32_1 = arith.constant 0 : i32
    return %arg0, %c0_i32, %c0_i32_0 : i32, i32, i32
  }
  func.func @transform_2(%arg0: i32, %arg1: i32) -> (i32, i32, i32) {
    %c0_i32 = arith.constant 0 : i32
    %c0_i32_0 = arith.constant 0 : i32
    %c0_i32_1 = arith.constant 0 : i32
    return %arg0, %c0_i32, %c0_i32_0 : i32, i32, i32
  }
  func.func @transform_3(%arg0: i32, %arg1: i32) -> (i32, i32) {
    %c0_i32 = arith.constant 0 : i32
    %c0_i32_0 = arith.constant 0 : i32
    %c0_i32_1 = arith.constant 0 : i32
    return %c0_i32, %c0_i32_0 : i32, i32
  }
  func.func @transform_4(%arg0: i32, %arg1: i32) -> (i32, i32) {
    %c0_i32 = arith.constant 0 : i32
    %c0_i32_0 = arith.constant 0 : i32
    %c0_i32_1 = arith.constant 0 : i32
    return %c0_i32, %c0_i32_0 : i32, i32
  }
  func.func @transform_5(%arg0: i32, %arg1: i32) -> (i32, i32) {
    %c0_i32 = arith.constant 0 : i32
    %c0_i32_0 = arith.constant 0 : i32
    %c0_i32_1 = arith.constant 0 : i32
    return %c0_i32, %c0_i32_0 : i32, i32
  }
  func.func @transform_6(%arg0: i32, %arg1: i32) -> (i32, i32) {
    %c0_i32 = arith.constant 0 : i32
    %c0_i32_0 = arith.constant 0 : i32
    %c0_i32_1 = arith.constant 0 : i32
    return %c0_i32, %c0_i32_0 : i32, i32
  }
  func.func @transform_7(%arg0: i32, %arg1: i32) -> (i32, i32) {
    %c0_i32 = arith.constant 0 : i32
    %c0_i32_0 = arith.constant 0 : i32
    %c0_i32_1 = arith.constant 0 : i32
    return %c0_i32, %c0_i32_0 : i32, i32
  }
  func.func @transform_8(%arg0: i32, %arg1: i32) -> (i32, i32) {
    %c0_i32 = arith.constant 0 : i32
    %c0_i32_0 = arith.constant 0 : i32
    %c0_i32_1 = arith.constant 0 : i32
    return %c0_i32, %c0_i32_0 : i32, i32
  }
  func.func @transform_9(%arg0: i32, %arg1: i32) -> (i32, i32) {
    %c0_i32 = arith.constant 0 : i32
    %c0_i32_0 = arith.constant 0 : i32
    %c0_i32_1 = arith.constant 0 : i32
    return %c0_i32, %c0_i32_0 : i32, i32
  }
  func.func @transform_10(%arg0: i32, %arg1: i32) -> (i32, i32, i32) {
    %c0_i32 = arith.constant 0 : i32
    %c0_i32_0 = arith.constant 0 : i32
    return %arg0, %arg1, %c0_i32 : i32, i32, i32
  }
}

</mosaic_0001>

<llo_original>
// kernel: tpu_custom_call.1
$region0: #{tpu_custom_call.1}
  #allocation0 [shape = 'u32[]', space=smem, size = 0x4, offset = 0x4, fixed_abs, tag = 'smem constant byte address 0x4 - core index']
  #allocation1 [shape = 'u32[72,128]{1,0:T(1,128)}', space=vmem, size = 0x9000, scoped, tag = 'internal scratch']
  #allocation2 [shape = 'f32[8,128]{1,0:T(8,128)}', space=vmem, size = 0x1000, scoped, tag = 'scratch operand']
  %s0 = inlined_call_operand.vmem [shape: f32[2,48,32], index: 0, kind: input, shape index: {}]
  %s1 = inlined_call_operand.vmem [shape: f32[2,8,32], index: 1, kind: input, shape index: {}]
  %s2 = inlined_call_operand.vmem [shape: f32[2,1,8], index: 2, kind: input, shape index: {}]
  %s3 = inlined_call_operand.vmem [shape: f32[32,128], index: 3, kind: input, shape index: {}]
  %s4 = inlined_call_operand.vmem [shape: f32[1,128], index: 4, kind: input, shape index: {}]
  %s5 = inlined_call_operand.vmem [shape: f32[32,128], index: 5, kind: input, shape index: {}]
  %s6 = inlined_call_operand.vmem [shape: f32[1,128], index: 6, kind: input, shape index: {}]
  %s7 = inlined_call_operand.vmem [shape: f32[32,128], index: 7, kind: input, shape index: {}]
  %s8 = inlined_call_operand.vmem [shape: f32[32,128], index: 8, kind: input, shape index: {}]
  %s9 = inlined_call_operand.vmem [shape: f32[1,128], index: 9, kind: input, shape index: {}]
  %s10 = inlined_call_operand.hbm [shape: f32[2,48,128], index: 10, kind: output, shape index: {}]
  %s11 = sld [smem:[#allocation0]]
  $region77: #{tpu_custom_call.1} parent=0
    _
  %s13 = ssub.s32 1, %s11
  %s14 = scalar_select 0, %s13, %s11
  $region1: #{tpu_custom_call.1} parent=0
    #allocation3 [shape = 'u8[16384]{0}', space=vmem, size = 0x4000, scoped, tag = 'output window, operand 0']
    #allocation4 [shape = 's32[2]{0}', space=sflag, size = 0x8, scoped, tag = 'scoped memory for tpu_custom_call.1']
    %15 = vsyncpa [#allocation4], 0
    %s16 = scalar_lea.sflag [#allocation4], 1
    %17 = vsyncpa %s16, 0
    loop: start=0, step=1, limit=8
    $region2: #{tpu_custom_call.1} parent=1 // loop_pre_header
      _
    $region3: #{tpu_custom_call.1} parent=1 // loop_header
      %s19 = sphi 0, %s23
      %p20 = scmp.ge.s32.totalorder %s19, 8
      %s26 = sphi 0, %s38
      %s27 = sphi 0, %s34
      %s28 = sphi 0, %s26
      %s29 = sphi 0, %s27
      %s30 = sphi 0, %s28
      %s31 = sphi 0, %s29
      %s43 = sphi 0, %s45
      %s46 = sphi 0, %s43
      %s47 = sphi 0, %s46
      %s63 = sphi 0, %s47
      %s69 = sphi 0, %s71
      %s72 = sphi 0, %s69
      %s73 = sphi 0, %s72
      %s89 = sphi 0, %s73
      %s95 = sphi 0, %s97
      %s98 = sphi 0, %s95
      %s99 = sphi 0, %s98
      %s115 = sphi 0, %s99
      %s119 = sphi 0, %s119
      %s121 = sphi 0, %s119
      %s122 = sphi 0, %s121
      %s136 = sphi 0, %s122
      %s140 = sphi 0, %s140
      %s142 = sphi 0, %s140
      %s143 = sphi 0, %s142
      %s157 = sphi 0, %s143
      %s161 = sphi 0, %s161
      %s163 = sphi 0, %s161
      %s164 = sphi 0, %s163
      %s178 = sphi 0, %s164
      %s182 = sphi 0, %s182
      %s184 = sphi 0, %s182
      %s185 = sphi 0, %s184
      %s199 = sphi 0, %s185
      %s203 = sphi 0, %s203
      %s205 = sphi 0, %s203
      %s206 = sphi 0, %s205
      %s220 = sphi 0, %s206
      %s224 = sphi 0, %s224
      %s226 = sphi 0, %s224
      %s227 = sphi 0, %s226
      %s241 = sphi 0, %s227
      %s245 = sphi 0, %s245
      %s247 = sphi 0, %s245
      %s248 = sphi 0, %s247
      %s262 = sphi 0, %s248
      %s270 = sphi 0, %s272
      %s273 = sphi 0, %s270
      %s274 = sphi 0, %s273
      %s290 = sphi 0, %s274
    $region4: #{tpu_custom_call.1} parent=1 // loop_header_branch
      %22 = sbr.rel (%p20) target = $region8
    $region5: #{tpu_custom_call.1} parent=1 // loop_body
      %s24 = ssub.s32 %s19, 1
      %s25 = ssub.s32 %s19, 2
      %s32 = sadd.s32 1, %s27
      %p33 = scmp.ge.s32.totalorder %s32, 3
      %s34 = scalar_select %p33, 0, %s32
      %s35 = sadd.s32 1, %s26
      %s36 = scalar_select %p33, %s35, %s26
      %p37 = scmp.ge.s32.totalorder %s36, 2
      %s38 = scalar_select %p37, 0, %s36
      %s39 = ssub.s32 %s26, %s38
      %s40 = ssub.s32 %s27, %s34
      %s41 = sor.u32 %s39, %s40
      %p42 = scmp.eq.s32.totalorder %s41, 0
      %s44 = sadd.s32 %s43, 1
      %s45 = scalar_select %p42, %s43, %s44
      %p48 = pneg %p42
      %p49 = scmp.eq.s32.totalorder %s19, 5
      %p50 = por %p48, %p49
      %p51 = scmp.ne.s32.totalorder %s43, %s46
      %p52 = scmp.eq.s32.totalorder %s19, 0
      %p53 = por %p51, %p52
      %p54 = scmp.ne.s32.totalorder %s43, %s46
      %p55 = scmp.eq.s32.totalorder %s24, 5
      %p56 = por %p54, %p55
      %p57 = scmp.ne.s32.totalorder %s46, %s47
      %p58 = scmp.eq.s32.totalorder %s24, 0
      %p59 = por %p57, %p58
      %p60 = scmp.ne.s32.totalorder %s46, %s47
      %p61 = scmp.eq.s32.totalorder %s25, 5
      %p62 = por %p60, %p61
      %p64 = scmp.ne.s32.totalorder %s47, %s63
      %p65 = scmp.eq.s32.totalorder %s25, 0
      %p66 = por %p64, %p65
      %s67 = ssub.s32 %s26, %s38
      %p68 = scmp.eq.s32.totalorder %s67, 0
      %s70 = sadd.s32 %s69, 1
      %s71 = scalar_select %p68, %s69, %s70
      %p74 = pneg %p68
      %p75 = scmp.eq.s32.totalorder %s19, 5
      %p76 = por %p74, %p75
      %p77 = scmp.ne.s32.totalorder %s69, %s72
      %p78 = scmp.eq.s32.totalorder %s19, 0
      %p79 = por %p77, %p78
      %p80 = scmp.ne.s32.totalorder %s69, %s72
      %p81 = scmp.eq.s32.totalorder %s24, 5
      %p82 = por %p80, %p81
      %p83 = scmp.ne.s32.totalorder %s72, %s73
      %p84 = scmp.eq.s32.totalorder %s24, 0
      %p85 = por %p83, %p84
      %p86 = scmp.ne.s32.totalorder %s72, %s73
      %p87 = scmp.eq.s32.totalorder %s25, 5
      %p88 = por %p86, %p87
      %p90 = scmp.ne.s32.totalorder %s73, %s89
      %p91 = scmp.eq.s32.totalorder %s25, 0
      %p92 = por %p90, %p91
      %s93 = ssub.s32 %s26, %s38
      %p94 = scmp.eq.s32.totalorder %s93, 0
      %s96 = sadd.s32 %s95, 1
      %s97 = scalar_select %p94, %s95, %s96
      %p100 = pneg %p94
      %p101 = scmp.eq.s32.totalorder %s19, 5
      %p102 = por %p100, %p101
      %p103 = scmp.ne.s32.totalorder %s95, %s98
      %p104 = scmp.eq.s32.totalorder %s19, 0
      %p105 = por %p103, %p104
      %p106 = scmp.ne.s32.totalorder %s95, %s98
      %p107 = scmp.eq.s32.totalorder %s24, 5
      %p108 = por %p106, %p107
      %p109 = scmp.ne.s32.totalorder %s98, %s99
      %p110 = scmp.eq.s32.totalorder %s24, 0
      %p111 = por %p109, %p110
      %p112 = scmp.ne.s32.totalorder %s98, %s99
      %p113 = scmp.eq.s32.totalorder %s25, 5
      %p114 = por %p112, %p113
      %p116 = scmp.ne.s32.totalorder %s99, %s115
      %p117 = scmp.eq.s32.totalorder %s25, 0
      %p118 = por %p116, %p117
      %s120 = sadd.s32 %s119, 1
      %p123 = scmp.eq.s32.totalorder %s19, 5
      %p124 = scmp.ne.s32.totalorder %s119, %s121
      %p125 = scmp.eq.s32.totalorder %s19, 0
      %p126 = por %p124, %p125
      %p127 = scmp.ne.s32.totalorder %s119, %s121
      %p128 = scmp.eq.s32.totalorder %s24, 5
      %p129 = por %p127, %p128
      %p130 = scmp.ne.s32.totalorder %s121, %s122
      %p131 = scmp.eq.s32.totalorder %s24, 0
      %p132 = por %p130, %p131
      %p133 = scmp.ne.s32.totalorder %s121, %s122
      %p134 = scmp.eq.s32.totalorder %s25, 5
      %p135 = por %p133, %p134
      %p137 = scmp.ne.s32.totalorder %s122, %s136
      %p138 = scmp.eq.s32.totalorder %s25, 0
      %p139 = por %p137, %p138
      %s141 = sadd.s32 %s140, 1
      %p144 = scmp.eq.s32.totalorder %s19, 5
      %p145 = scmp.ne.s32.totalorder %s140, %s142
      %p146 = scmp.eq.s32.totalorder %s19, 0
      %p147 = por %p145, %p146
      %p148 = scmp.ne.s32.totalorder %s140, %s142
      %p149 = scmp.eq.s32.totalorder %s24, 5
      %p150 = por %p148, %p149
      %p151 = scmp.ne.s32.totalorder %s142, %s143
      %p152 = scmp.eq.s32.totalorder %s24, 0
      %p153 = por %p151, %p152
      %p154 = scmp.ne.s32.totalorder %s142, %s143
      %p155 = scmp.eq.s32.totalorder %s25, 5
      %p156 = por %p154, %p155
      %p158 = scmp.ne.s32.totalorder %s143, %s157
      %p159 = scmp.eq.s32.totalorder %s25, 0
      %p160 = por %p158, %p159
      %s162 = sadd.s32 %s161, 1
      %p165 = scmp.eq.s32.totalorder %s19, 5
      %p166 = scmp.ne.s32.totalorder %s161, %s163
      %p167 = scmp.eq.s32.totalorder %s19, 0
      %p168 = por %p166, %p167
      %p169 = scmp.ne.s32.totalorder %s161, %s163
      %p170 = scmp.eq.s32.totalorder %s24, 5
      %p171 = por %p169, %p170
      %p172 = scmp.ne.s32.totalorder %s163, %s164
      %p173 = scmp.eq.s32.totalorder %s24, 0
      %p174 = por %p172, %p173
      %p175 = scmp.ne.s32.totalorder %s163, %s164
      %p176 = scmp.eq.s32.totalorder %s25, 5
      %p177 = por %p175, %p176
      %p179 = scmp.ne.s32.totalorder %s164, %s178
      %p180 = scmp.eq.s32.totalorder %s25, 0
      %p181 = por %p179, %p180
      %s183 = sadd.s32 %s182, 1
      %p186 = scmp.eq.s32.totalorder %s19, 5
      %p187 = scmp.ne.s32.totalorder %s182, %s184
      %p188 = scmp.eq.s32.totalorder %s19, 0
      %p189 = por %p187, %p188
      %p190 = scmp.ne.s32.totalorder %s182, %s184
      %p191 = scmp.eq.s32.totalorder %s24, 5
      %p192 = por %p190, %p191
      %p193 = scmp.ne.s32.totalorder %s184, %s185
      %p194 = scmp.eq.s32.totalorder %s24, 0
      %p195 = por %p193, %p194
      %p196 = scmp.ne.s32.totalorder %s184, %s185
      %p197 = scmp.eq.s32.totalorder %s25, 5
      %p198 = por %p196, %p197
      %p200 = scmp.ne.s32.totalorder %s185, %s199
      %p201 = scmp.eq.s32.totalorder %s25, 0
      %p202 = por %p200, %p201
      %s204 = sadd.s32 %s203, 1
      %p207 = scmp.eq.s32.totalorder %s19, 5
      %p208 = scmp.ne.s32.totalorder %s203, %s205
      %p209 = scmp.eq.s32.totalorder %s19, 0
      %p210 = por %p208, %p209
      %p211 = scmp.ne.s32.totalorder %s203, %s205
      %p212 = scmp.eq.s32.totalorder %s24, 5
      %p213 = por %p211, %p212
      %p214 = scmp.ne.s32.totalorder %s205, %s206
      %p215 = scmp.eq.s32.totalorder %s24, 0
      %p216 = por %p214, %p215
      %p217 = scmp.ne.s32.totalorder %s205, %s206
      %p218 = scmp.eq.s32.totalorder %s25, 5
      %p219 = por %p217, %p218
      %p221 = scmp.ne.s32.totalorder %s206, %s220
      %p222 = scmp.eq.s32.totalorder %s25, 0
      %p223 = por %p221, %p222
      %s225 = sadd.s32 %s224, 1
      %p228 = scmp.eq.s32.totalorder %s19, 5
      %p229 = scmp.ne.s32.totalorder %s224, %s226
      %p230 = scmp.eq.s32.totalorder %s19, 0
      %p231 = por %p229, %p230
      %p232 = scmp.ne.s32.totalorder %s224, %s226
      %p233 = scmp.eq.s32.totalorder %s24, 5
      %p234 = por %p232, %p233
      %p235 = scmp.ne.s32.totalorder %s226, %s227
      %p236 = scmp.eq.s32.totalorder %s24, 0
      %p237 = por %p235, %p236
      %p238 = scmp.ne.s32.totalorder %s226, %s227
      %p239 = scmp.eq.s32.totalorder %s25, 5
      %p240 = por %p238, %p239
      %p242 = scmp.ne.s32.totalorder %s227, %s241
      %p243 = scmp.eq.s32.totalorder %s25, 0
      %p244 = por %p242, %p243
      %s246 = sadd.s32 %s245, 1
      %p249 = scmp.eq.s32.totalorder %s19, 5
      %p250 = scmp.ne.s32.totalorder %s245, %s247
      %p251 = scmp.eq.s32.totalorder %s19, 0
      %p252 = por %p250, %p251
      %p253 = scmp.ne.s32.totalorder %s245, %s247
      %p254 = scmp.eq.s32.totalorder %s24, 5
      %p255 = por %p253, %p254
      %p256 = scmp.ne.s32.totalorder %s247, %s248
      %p257 = scmp.eq.s32.totalorder %s24, 0
      %p258 = por %p256, %p257
      %p259 = scmp.ne.s32.totalorder %s247, %s248
      %p260 = scmp.eq.s32.totalorder %s25, 5
      %p261 = por %p259, %p260
      %p263 = scmp.ne.s32.totalorder %s248, %s262
      %p264 = scmp.eq.s32.totalorder %s25, 0
      %p265 = por %p263, %p264
      %s266 = ssub.s32 %s26, %s38
      %s267 = ssub.s32 %s27, %s34
      %s268 = sor.u32 %s266, %s267
      %p269 = scmp.eq.s32.totalorder %s268, 0
      %s271 = sadd.s32 %s270, 1
      %s272 = scalar_select %p269, %s270, %s271
      %p275 = pneg %p269
      %p276 = scmp.eq.s32.totalorder %s19, 5
      %p277 = por %p275, %p276
      %p278 = scmp.ne.s32.totalorder %s270, %s273
      %p279 = scmp.eq.s32.totalorder %s19, 0
      %p280 = por %p278, %p279
      %p281 = scmp.ne.s32.totalorder %s270, %s273
      %p282 = scmp.eq.s32.totalorder %s24, 5
      %p283 = por %p281, %p282
      %p284 = scmp.ne.s32.totalorder %s273, %s274
      %p285 = scmp.eq.s32.totalorder %s24, 0
      %p286 = por %p284, %p285
      %p287 = scmp.ne.s32.totalorder %s273, %s274
      %p288 = scmp.eq.s32.totalorder %s25, 5
      %p289 = por %p287, %p288
      %p291 = scmp.ne.s32.totalorder %s274, %s290
      %p292 = scmp.eq.s32.totalorder %s25, 0
      %p293 = por %p291, %p292
      %p294 = scmp.le.s32.totalorder 1, %s19
      %p295 = scmp.lt.s32.totalorder %s19, 7
      %p296 = pnand %p294, %p295
      %p297 = pneg %p296
      // Predicated region
      $region9: #{tpu_custom_call.1} parent=5 // pred_check
        _
      $region10: #{tpu_custom_call.1} parent=5 // pred_check_branch
        %299 = sbr.rel (%p296) target = $region12
      $region11: #{tpu_custom_call.1} parent=5 // pred_region
        %s300 = ssub.s32 %s19, 1
        // Predicated region
        $region13: #{tpu_custom_call.1} parent=11 // pred_check
          %p301 = pneg %p132
        $region14: #{tpu_custom_call.1} parent=11 // pred_check_branch
          %303 = sbr.rel (%p301) target = $region16
        $region15: #{tpu_custom_call.1} parent=11 // pred_region
          _
        $region16: #{tpu_custom_call.1} parent=11 // pred_fallthru
          _
        // Predicated region
        $region17: #{tpu_custom_call.1} parent=11 // pred_check
          %p304 = pneg %p153
        $region18: #{tpu_custom_call.1} parent=11 // pred_check_branch
          %306 = sbr.rel (%p304) target = $region20
        $region19: #{tpu_custom_call.1} parent=11 // pred_region
          _
        $region20: #{tpu_custom_call.1} parent=11 // pred_fallthru
          _
        // Predicated region
        $region21: #{tpu_custom_call.1} parent=11 // pred_check
          %p307 = pneg %p174
        $region22: #{tpu_custom_call.1} parent=11 // pred_check_branch
          %309 = sbr.rel (%p307) target = $region24
        $region23: #{tpu_custom_call.1} parent=11 // pred_region
          _
        $region24: #{tpu_custom_call.1} parent=11 // pred_fallthru
          _
        // Predicated region
        $region25: #{tpu_custom_call.1} parent=11 // pred_check
          %p310 = pneg %p195
        $region26: #{tpu_custom_call.1} parent=11 // pred_check_branch
          %312 = sbr.rel (%p310) target = $region28
        $region27: #{tpu_custom_call.1} parent=11 // pred_region
          _
        $region28: #{tpu_custom_call.1} parent=11 // pred_fallthru
          _
        // Predicated region
        $region29: #{tpu_custom_call.1} parent=11 // pred_check
          %p313 = pneg %p216
        $region30: #{tpu_custom_call.1} parent=11 // pred_check_branch
          %315 = sbr.rel (%p313) target = $region32
        $region31: #{tpu_custom_call.1} parent=11 // pred_region
          _
        $region32: #{tpu_custom_call.1} parent=11 // pred_fallthru
          _
        // Predicated region
        $region33: #{tpu_custom_call.1} parent=11 // pred_check
          %p316 = pneg %p237
        $region34: #{tpu_custom_call.1} parent=11 // pred_check_branch
          %318 = sbr.rel (%p316) target = $region36
        $region35: #{tpu_custom_call.1} parent=11 // pred_region
          _
        $region36: #{tpu_custom_call.1} parent=11 // pred_fallthru
          _
        // Predicated region
        $region37: #{tpu_custom_call.1} parent=11 // pred_check
          %p319 = pneg %p258
        $region38: #{tpu_custom_call.1} parent=11 // pred_check_branch
          %321 = sbr.rel (%p319) target = $region40
        $region39: #{tpu_custom_call.1} parent=11 // pred_region
          _
        $region40: #{tpu_custom_call.1} parent=11 // pred_fallthru
          _
      $region12: #{tpu_custom_call.1} parent=5 // pred_fallthru
        _
      %p322 = scmp.lt.s32.totalorder %s19, 6
      // Predicated region
      $region41: #{tpu_custom_call.1} parent=5 // pred_check
        %p323 = pneg %p322
      $region42: #{tpu_custom_call.1} parent=5 // pred_check_branch
        %325 = sbr.rel (%p323) target = $region44
      $region43: #{tpu_custom_call.1} parent=5 // pred_region
        // Predicated region
        $region45: #{tpu_custom_call.1} parent=43 // pred_check
          %p326 = pneg %p53
        $region46: #{tpu_custom_call.1} parent=43 // pred_check_branch
          %328 = sbr.rel (%p326) target = $region48
        $region47: #{tpu_custom_call.1} parent=43 // pred_region
          %s329 = smul.u32 2, %s27
          %p330 = scmp.lt.s32.totalorder %s26, 1
          %s331 = scalar_select %p330, %s26, 1
          %p332 = scmp.lt.s32.totalorder %s329, 5
          %s333 = scalar_select %p332, %s329, 5
          %s334 = smul.addr %s331, 6
          %s335 = sadd.s32 %s333, %s334
          %s336 = smul.addr %s335, 8
          %s337 = scalar_lea.vmem %s0, %s336
          %s338 = smul.u32 2, %s27
        $region48: #{tpu_custom_call.1} parent=43 // pred_fallthru
          _
        // Predicated region
        $region49: #{tpu_custom_call.1} parent=43 // pred_check
          %p339 = pneg %p79
        $region50: #{tpu_custom_call.1} parent=43 // pred_check_branch
          %341 = sbr.rel (%p339) target = $region52
        $region51: #{tpu_custom_call.1} parent=43 // pred_region
          %p342 = scmp.lt.s32.totalorder %s26, 1
          %s343 = scalar_select %p342, %s26, 1
          %s344 = smul.addr %s343, 8
          %s345 = scalar_lea.vmem %s1, %s344
        $region52: #{tpu_custom_call.1} parent=43 // pred_fallthru
          _
        // Predicated region
        $region53: #{tpu_custom_call.1} parent=43 // pred_check
          %p346 = pneg %p105
        $region54: #{tpu_custom_call.1} parent=43 // pred_check_branch
          %348 = sbr.rel (%p346) target = $region56
        $region55: #{tpu_custom_call.1} parent=43 // pred_region
          %p349 = scmp.lt.s32.totalorder %s26, 1
          %s350 = scalar_select %p349, %s26, 1
          %s351 = scalar_lea.vmem %s2, %s350
        $region56: #{tpu_custom_call.1} parent=43 // pred_fallthru
          _
      $region44: #{tpu_custom_call.1} parent=5 // pred_fallthru
        _
      %p352 = scmp.le.s32.totalorder 1, %s19
      %p353 = scmp.lt.s32.totalorder %s19, 7
      %p354 = pnand %p352, %p353
      %p355 = pneg %p354
      // Predicated region
      $region57: #{tpu_custom_call.1} parent=5 // pred_check
        _
      $region58: #{tpu_custom_call.1} parent=5 // pred_check_branch
        %357 = sbr.rel (%p354) target = $region60
      $region59: #{tpu_custom_call.1} parent=5 // pred_region
        %s358 = ssub.s32 %s19, 1
        %s359 = smul.u32 2, %s29
        %p360 = scmp.lt.s32.totalorder %s28, 1
        %s361 = scalar_select %p360, %s28, 1
        %p362 = scmp.lt.s32.totalorder %s359, 5
        %s363 = scalar_select %p362, %s359, 5
        %s364 = smul.addr %s361, 6
        %s365 = sadd.s32 %s363, %s364
        %s366 = smul.addr %s365, 8
        %s367 = scalar_lea.vmem %s0, %s366
        %p368 = pneg %p59
        %p369 = pneg %p56
        %p370 = scmp.lt.s32.totalorder %s28, 1
        %s371 = scalar_select %p370, %s28, 1
        %s372 = smul.addr %s371, 8
        %s373 = scalar_lea.vmem %s1, %s372
        %p374 = pneg %p85
        %p375 = pneg %p82
        %p376 = scmp.lt.s32.totalorder %s28, 1
        %s377 = scalar_select %p376, %s28, 1
        %s378 = scalar_lea.vmem %s2, %s377
        %p379 = pneg %p111
        %p380 = pneg %p108
        %p381 = pneg %p132
        %p382 = pneg %p129
        %p383 = pneg %p153
        %p384 = pneg %p150
        %p385 = pneg %p174
        %p386 = pneg %p171
        %p387 = pneg %p195
        %p388 = pneg %p192
        %p389 = pneg %p216
        %p390 = pneg %p213
        %p391 = pneg %p237
        %p392 = pneg %p234
        %p393 = pneg %p258
        %p394 = pneg %p255
        %p395 = pneg %p286
        %p396 = pneg %p283
        %s397 = sand.u32 %s273, 1
        %s398 = scalar_lea.sflag [#allocation4], %s397
        %s399 = sand.u32 %s273, 1
        %s400 = smul.addr %s399, 16
        %s401 = scalar_lea.vmem [#allocation3], %s400
        %s402 = smul.u32 2, %s29
        %p403 = scmp.lt.s32.totalorder %s28, 1
        %s404 = scalar_select %p403, %s28, 1
        %p405 = scmp.lt.s32.totalorder %s402, 5
        %s406 = scalar_select %p405, %s402, 5
        %s407 = smul.addr %s404, 6
        %s408 = sadd.s32 %s406, %s407
        %s409 = smul.addr %s408, 8
        %s410 = scalar_lea.vmem %s0, %s409
        %s411 = smul.u32 2, %s29
        %p412 = scmp.lt.s32.totalorder %s28, 1
        %s413 = scalar_select %p412, %s28, 1
        %s414 = smul.addr %s413, 8
        %s415 = scalar_lea.vmem %s1, %s414
        %p416 = scmp.lt.s32.totalorder %s28, 1
        %s417 = scalar_select %p416, %s28, 1
        %s418 = scalar_lea.vmem %s2, %s417
        %s419 = smul.u32 2, %s29
        %p420 = scmp.eq.s32.totalorder %s29, 0
        // Predicated region
        $region61: #{tpu_custom_call.1} parent=59 // pred_check
          %p421 = pneg %p420
        $region62: #{tpu_custom_call.1} parent=59 // pred_check_branch
          %423 = sbr.rel (%p421) target = $region64
        $region63: #{tpu_custom_call.1} parent=59 // pred_region
          %v424 = vld [vmem:[%s415] sm:$0xff]
          %v425 = vld [vmem:[%s5] sm:$0xff]
          %v426 = vld [vmem:[%s5 + $0x8] sm:$0xff]
          %v427 = vld [vmem:[%s5 + $0x10] sm:$0xff]
          %v428 = vld [vmem:[%s5 + $0x18] sm:$0xff]
          %v429 = vld [vmem:[%s6] sm:$0x1]
          %v431 = vperm.slane %v429, 0
          %vm433 = vcmask 261120
          %v435 = vsel %vm433, %v424, 0
          %437 = vmatpush.msra.mxu0 0.0
          %438 = vmatpush.msra.mxu0 0.0
          %439 = vmatpush.msra.mxu0 0.0
          %440 = vmatpush.msra.mxu0 0.0
          %441 = vmatpush.msra.mxu0 0.0
          %442 = vmatpush.msra.mxu0 0.0
          %443 = vmatpush.msra.mxu0 0.0
          %444 = vmatpush.msra.mxu0 0.0
          %445 = vmatpush.msra.mxu0 0.0
          %446 = vmatpush.msra.mxu0 0.0
          %447 = vmatpush.msra.mxu0 0.0
          %448 = vmatpush.msra.mxu0 0.0
          %449 = vmatpush.msra.mxu0 %v428
          %450 = vmatpush.msra.mxu0 %v427
          %451 = vmatpush.msra.mxu0 %v426
          %452 = vmatpush.msra.mxu0 %v425
          %453 = vmatmul.f32.gmra.mxu0 %v435
          %v454 = vpop.f32.mrf.mxu0
          %v455 = vadd.f32 %v431, %v454
          %456 = vdwg.mxu0
          %v457 = vmax.f32 %v455, 0.0
          %458 = vst [vmem:[#allocation2] sm:$0xff] %v457
        $region64: #{tpu_custom_call.1} parent=59 // pred_fallthru
          _
        %v459 = vld [vmem:[%s410] sm:$0xff]
        %v460 = vld [vmem:[%s410 + $0x8] sm:$0xff]
        %v461 = vld [vmem:[%s3] sm:$0xff]
        %v462 = vld [vmem:[%s3 + $0x8] sm:$0xff]
        %v463 = vld [vmem:[%s3 + $0x10] sm:$0xff]
        %v464 = vld [vmem:[%s3 + $0x18] sm:$0xff]
        %v465 = vld [vmem:[%s4] sm:$0x1]
        %v467 = vperm.slane %v465, 0
        %vm469 = vcmask 261120
        %v471 = vsel %vm469, %v459, 0
        %v474 = vsel %vm469, %v460, 0
        %476 = vmatpush.msra.mxu0 0.0
        %477 = vmatpush.msra.mxu0 0.0
        %478 = vmatpush.msra.mxu0 0.0
        %479 = vmatpush.msra.mxu0 0.0
        %480 = vmatpush.msra.mxu0 0.0
        %481 = vmatpush.msra.mxu0 0.0
        %482 = vmatpush.msra.mxu0 0.0
        %483 = vmatpush.msra.mxu0 0.0
        %484 = vmatpush.msra.mxu0 0.0
        %485 = vmatpush.msra.mxu0 0.0
        %486 = vmatpush.msra.mxu0 0.0
        %487 = vmatpush.msra.mxu0 0.0
        %488 = vmatpush.msra.mxu0 %v464
        %489 = vmatpush.msra.mxu0 %v463
        %490 = vmatpush.msra.mxu0 %v462
        %491 = vmatpush.msra.mxu0 %v461
        %492 = vmatmul.f32.gmra.mxu0 %v471
        %v493 = vpop.f32.mrf.mxu0
        %v494 = vadd.f32 %v467, %v493
        %495 = vmatmul.f32.gmra.mxu0 %v474
        %v496 = vpop.f32.mrf.mxu0
        %v497 = vadd.f32 %v467, %v496
        %498 = vdwg.mxu0
        %v499 = vmax.f32 %v494, 0.0
        %v500 = vmax.f32 %v497, 0.0
        %v501 = vld [vmem:[#allocation2] sm:$0xff]
        %502 = vmatpush.xpose.msra.mxu0 0.0
        %503 = vmatpush.xpose.msra.mxu0 0.0
        %504 = vmatpush.xpose.msra.mxu0 0.0
        %505 = vmatpush.xpose.msra.mxu0 0.0
        %506 = vmatpush.xpose.msra.mxu0 0.0
        %507 = vmatpush.xpose.msra.mxu0 0.0
        %508 = vmatpush.xpose.msra.mxu0 0.0
        %509 = vmatpush.xpose.msra.mxu0 0.0
        %510 = vmatpush.xpose.msra.mxu0 0.0
        %511 = vmatpush.xpose.msra.mxu0 0.0
        %512 = vmatpush.xpose.msra.mxu0 0.0
        %513 = vmatpush.xpose.msra.mxu0 0.0
        %514 = vmatpush.xpose.msra.mxu0 0.0
        %515 = vmatpush.xpose.msra.mxu0 0.0
        %516 = vmatpush.xpose.msra.mxu0 0.0
        %517 = vmatpush.xpose.msra.mxu0 %v501
        %518 = vmatmul.f32.gmra.mxu0 %v499
        %v519 = vpop.f32.mrf.mxu0
        %v520 = vadd.f32 0.0, %v519
        %521 = vmatmul.f32.gmra.mxu0 %v500
        %v522 = vpop.f32.mrf.mxu0
        %v523 = vadd.f32 0.0, %v522
        %524 = vdwg.mxu0
        %v525 = vmul.f32 %v520, 0.17677669
        %v526 = vmul.f32 %v523, 0.17677669
        %v527 = vld [vmem:[%s418] sm:$0x1]
        %v528 = vsub.f32 1.0, %v527
        %v529 = vmul.f32 %v528, 1e+30
        %v531 = vperm.slane %v529, 0
        %v533 = vsub.f32 %v525, %v531
        %v534 = vsub.f32 %v526, %v531
        %vm535 = vcmask 64512
        %v536 = vsel %vm535, %v533, -inf
        %537 = vmax.xlane.f32.xlu0 %v536
        %v538 = vpop.xlane.xlu0 %537
        %v539 = vsel %vm535, %v534, -inf
        %540 = vmax.xlane.f32.xlu0 %v539
        %v541 = vpop.xlane.xlu0 %540
        %v542 = vsub.f32 %v533, %v538
        %v543 = vsub.f32 %v534, %v541
        %v544 = vmul.f32 %v542, 1.442695
        %v545 = vpow.pop %v544
        %v546 = vmul.f32 %v543, 1.442695
        %v547 = vpow.pop %v546
        %v548 = vsel %vm535, %v545, 0.0
        %549 = vadd.xlane.f32.xlu0 %v548
        %v550 = vpop.xlane.xlu0 %549
        %v551 = vsel %vm535, %v547, 0.0
        %552 = vadd.xlane.f32.xlu0 %v551
        %v553 = vpop.xlane.xlu0 %552
        %v554 = vrcp.pop %v550
        %v555 = vmul.f32 %v550, %v554
        %v556 = vsub.f32 1.0, %v555
        %v557 = vmul.f32 %v554, %v556
        %v558 = vadd.f32 %v554, %v557
        %vm559 = vweird.f32 %v550
        %vm560 = vweird.f32 %v554
        %vm561 = vmor %vm559, %vm560
        %v562 = vsel %vm561, %v554, %v558
        %v563 = vand.u32 2147483647, %v550
        %vm564 = vcmp.eq.f32.partialorder %v563, 8.507059e+37
        %v565 = vand.u32 %v550, 2147483648
        %v566 = vor.u32 1.1754944e-38, %v565
        %v567 = vsel %vm564, %v566, %v562
        %v568 = vrcp.pop %v553
        %v569 = vmul.f32 %v553, %v568
        %v570 = vsub.f32 1.0, %v569
        %v571 = vmul.f32 %v568, %v570
        %v572 = vadd.f32 %v568, %v571
        %vm573 = vweird.f32 %v553
        %vm574 = vweird.f32 %v568
        %vm575 = vmor %vm573, %vm574
        %v576 = vsel %vm575, %v568, %v572
        %v577 = vand.u32 2147483647, %v553
        %vm578 = vcmp.eq.f32.partialorder %v577, 8.507059e+37
        %v579 = vand.u32 %v553, 2147483648
        %v580 = vor.u32 1.1754944e-38, %v579
        %v581 = vsel %vm578, %v580, %v576
        %v582 = vmul.f32 %v545, %v567
        %v583 = vmul.f32 %v547, %v581
        %v584 = vld [vmem:[%s415] sm:$0xff]
        %v586 = vsel %vm535, %v582, 0
        %v589 = vsel %vm535, %v583, 0
        %591 = vmatpush.msra.mxu0 0.0
        %592 = vmatpush.msra.mxu0 0.0
        %593 = vmatpush.msra.mxu0 0.0
        %594 = vmatpush.msra.mxu0 0.0
        %595 = vmatpush.msra.mxu0 0.0
        %596 = vmatpush.msra.mxu0 0.0
        %597 = vmatpush.msra.mxu0 0.0
        %598 = vmatpush.msra.mxu0 0.0
        %599 = vmatpush.msra.mxu0 0.0
        %600 = vmatpush.msra.mxu0 0.0
        %601 = vmatpush.msra.mxu0 0.0
        %602 = vmatpush.msra.mxu0 0.0
        %603 = vmatpush.msra.mxu0 0.0
        %604 = vmatpush.msra.mxu0 0.0
        %605 = vmatpush.msra.mxu0 0.0
        %606 = vmatpush.msra.mxu0 %v584
        %607 = vmatmul.f32.gmra.mxu0 %v586
        %v608 = vpop.f32.mrf.mxu0
        %v609 = vadd.f32 0.0, %v608
        %610 = vmatmul.f32.gmra.mxu0 %v589
        %v611 = vpop.f32.mrf.mxu0
        %v612 = vadd.f32 0.0, %v611
        %613 = vdwg.mxu0
        %v614 = vld [vmem:[%s7] sm:$0xff]
        %v615 = vld [vmem:[%s7 + $0x8] sm:$0xff]
        %v616 = vld [vmem:[%s7 + $0x10] sm:$0xff]
        %v617 = vld [vmem:[%s7 + $0x18] sm:$0xff]
        %v618 = vld [vmem:[%s8] sm:$0xff]
        %v619 = vld [vmem:[%s8 + $0x8] sm:$0xff]
        %v620 = vld [vmem:[%s8 + $0x10] sm:$0xff]
        %v621 = vld [vmem:[%s8 + $0x18] sm:$0xff]
        %v623 = vsel %vm469, %v609, 0
        %v626 = vsel %vm469, %v612, 0
        %628 = vmatpush.msra.mxu0 0.0
        %629 = vmatpush.msra.mxu0 0.0
        %630 = vmatpush.msra.mxu0 0.0
        %631 = vmatpush.msra.mxu0 0.0
        %632 = vmatpush.msra.mxu0 0.0
        %633 = vmatpush.msra.mxu0 0.0
        %634 = vmatpush.msra.mxu0 0.0
        %635 = vmatpush.msra.mxu0 0.0
        %636 = vmatpush.msra.mxu0 0.0
        %637 = vmatpush.msra.mxu0 0.0
        %638 = vmatpush.msra.mxu0 0.0
        %639 = vmatpush.msra.mxu0 0.0
        %640 = vmatpush.msra.mxu0 %v621
        %641 = vmatpush.msra.mxu0 %v620
        %642 = vmatpush.msra.mxu0 %v619
        %643 = vmatpush.msra.mxu0 %v618
        %644 = vmatmul.f32.gmra.mxu0 %v623
        %v645 = vpop.f32.mrf.mxu0
        %v646 = vadd.f32 0.0, %v645
        %647 = vmatmul.f32.gmra.mxu0 %v626
        %v648 = vpop.f32.mrf.mxu0
        %v649 = vadd.f32 0.0, %v648
        %650 = vdwg.mxu0
        %651 = vmatpush.msra.mxu0 0.0
        %652 = vmatpush.msra.mxu0 0.0
        %653 = vmatpush.msra.mxu0 0.0
        %654 = vmatpush.msra.mxu0 0.0
        %655 = vmatpush.msra.mxu0 0.0
        %656 = vmatpush.msra.mxu0 0.0
        %657 = vmatpush.msra.mxu0 0.0
        %658 = vmatpush.msra.mxu0 0.0
        %659 = vmatpush.msra.mxu0 0.0
        %660 = vmatpush.msra.mxu0 0.0
        %661 = vmatpush.msra.mxu0 0.0
        %662 = vmatpush.msra.mxu0 0.0
        %663 = vmatpush.msra.mxu0 %v617
        %664 = vmatpush.msra.mxu0 %v616
        %665 = vmatpush.msra.mxu0 %v615
        %666 = vmatpush.msra.mxu0 %v614
        %667 = vmatmul.f32.gmra.mxu0 %v471
        %v668 = vpop.f32.mrf.mxu0
        %v669 = vadd.f32 %v646, %v668
        %670 = vmatmul.f32.gmra.mxu0 %v474
        %v671 = vpop.f32.mrf.mxu0
        %v672 = vadd.f32 %v649, %v671
        %673 = vdwg.mxu0
        %v674 = vld [vmem:[%s9] sm:$0x1]
        %v676 = vperm.slane %v674, 0
        %v678 = vadd.f32 %v669, %v676
        %v679 = vadd.f32 %v672, %v676
        %v680 = vsub.f32 0.0, %v678
        %v681 = vsub.f32 0.0, %v679
        %v682 = vmul.f32 %v680, 1.442695
        %v683 = vpow.pop %v682
        %v684 = vmul.f32 %v681, 1.442695
        %v685 = vpow.pop %v684
        %v686 = vadd.f32 %v683, 1.0
        %v687 = vadd.f32 %v685, 1.0
        %v688 = vrcp.pop %v686
        %v689 = vmul.f32 %v686, %v688
        %v690 = vsub.f32 1.0, %v689
        %v691 = vmul.f32 %v688, %v690
        %v692 = vadd.f32 %v688, %v691
        %vm693 = vweird.f32 %v686
        %vm694 = vweird.f32 %v688
        %vm695 = vmor %vm693, %vm694
        %v696 = vsel %vm695, %v688, %v692
        %v697 = vand.u32 2147483647, %v686
        %vm698 = vcmp.eq.f32.partialorder %v697, 8.507059e+37
        %v699 = vand.u32 %v686, 2147483648
        %v700 = vor.u32 1.1754944e-38, %v699
        %v701 = vsel %vm698, %v700, %v696
        %v702 = vmul.f32 1.0, %v701
        %v703 = vrcp.pop %v687
        %v704 = vmul.f32 %v687, %v703
        %v705 = vsub.f32 1.0, %v704
        %v706 = vmul.f32 %v703, %v705
        %v707 = vadd.f32 %v703, %v706
        %vm708 = vweird.f32 %v687
        %vm709 = vweird.f32 %v703
        %vm710 = vmor %vm708, %vm709
        %v711 = vsel %vm710, %v703, %v707
        %v712 = vand.u32 2147483647, %v687
        %vm713 = vcmp.eq.f32.partialorder %v712, 8.507059e+37
        %v714 = vand.u32 %v687, 2147483648
        %v715 = vor.u32 1.1754944e-38, %v714
        %v716 = vsel %vm713, %v715, %v711
        %v717 = vmul.f32 1.0, %v716
        %v718 = vtanh.pop %v678
        %v719 = vtanh.pop %v679
        %v720 = vmul.f32 %v702, %v718
        %v721 = vmul.f32 %v717, %v719
        %722 = vst [vmem:[%s401] sm:$0xff] %v720
        %723 = vst [vmem:[%s401 + $0x8] sm:$0xff] %v721
        %s724 = sand.u32 %s273, 1
        %s725 = scalar_lea.sflag [#allocation4], %s724
        %s726 = sand.u32 %s273, 1
        %s727 = smul.addr %s726, 16
        %s728 = scalar_lea.vmem [#allocation3], %s727
        // Predicated region
        $region65: #{tpu_custom_call.1} parent=59 // pred_check
          %p729 = pneg %p283
        $region66: #{tpu_custom_call.1} parent=59 // pred_check_branch
          %731 = sbr.rel (%p729) target = $region68
        $region67: #{tpu_custom_call.1} parent=59 // pred_region
          %s732 = smul.u32 2, %s29
          %734 = vsyncadd %s725, 0
          %s735 = smul.addr %s28, 6
          %s736 = sadd.s32 %s732, %s735
          %s737 = smul.addr %s736, 8
          %s738 = scalar_lea.hbm %s10, %s737
          %s739 = sshll.u32 %s728, 4
          %s740 = int_to_ptr.vmem [resolvable:$true] %s739
          %s741 = sshll.u32 %s738, 4
          %s742 = int_to_ptr.hbm [resolvable:$true] %s741
          %747 = dma.vmem_to_hbm [thread:$0]  %s740, 256, %s742, %s725, 128, 128, 8
        $region68: #{tpu_custom_call.1} parent=59 // pred_fallthru
          _
      $region60: #{tpu_custom_call.1} parent=5 // pred_fallthru
        _
      %p748 = scmp.le.s32.totalorder 2, %s19
      // Predicated region
      $region69: #{tpu_custom_call.1} parent=5 // pred_check
        %p749 = pneg %p748
      $region70: #{tpu_custom_call.1} parent=5 // pred_check_branch
        %751 = sbr.rel (%p749) target = $region72
      $region71: #{tpu_custom_call.1} parent=5 // pred_region
        %s752 = ssub.s32 %s19, 2
        // Predicated region
        $region73: #{tpu_custom_call.1} parent=71 // pred_check
          %p753 = pneg %p289
        $region74: #{tpu_custom_call.1} parent=71 // pred_check_branch
          %755 = sbr.rel (%p753) target = $region76
        $region75: #{tpu_custom_call.1} parent=71 // pred_region
          %s756 = sand.u32 %s274, 1
          %s757 = scalar_lea.sflag [#allocation4], %s756
          %s758 = sand.u32 %s274, 1
          %s759 = smul.addr %s758, 16
          %s760 = scalar_lea.vmem [#allocation3], %s759
          %762 = dma.done %s757, 256
        $region76: #{tpu_custom_call.1} parent=71 // pred_fallthru
          _
      $region72: #{tpu_custom_call.1} parent=5 // pred_fallthru
        _
    $region6: #{tpu_custom_call.1} parent=1 // loop_footer
      %s23 = sadd.s32 1, %s19
    $region7: #{tpu_custom_call.1} parent=1 // loop_footer_branch
      %18 = sbr.rel target = $region3
    $region8: #{tpu_custom_call.1} parent=1 // loop_exit
      _
    %763 = vsyncpa [#allocation4], 1
    %s764 = scalar_lea.sflag [#allocation4], 1
    %765 = vsyncpa %s764, 1

</llo_original>
